<compile_context>
chip_gen: v6e
topology: v6e:2x2x1
jax: 0.10.0
libtpu: 0.0.40
codegen_flags: <defaults>
</compile_context>

<pallas_src>
import jax
import jax.numpy as jnp
from jax import lax
from jax.experimental import pallas as pl
from jax.experimental.pallas import tpu as pltpu


def _fal_kernel(x_ref, y_ref, h1_ref, h2_ref, wy_ref, we_ref, b_ref,
                feat_ref, edge_ref):
    x = x_ref[...]        # (Bt, N, C)  bf16
    y = y_ref[...]        # (Bt, E, C)  bf16
    h1 = h1_ref[...]      # (Bt, N, E)  bf16   H * diag(De^-1)
    h2 = h2_ref[...]      # (Bt, N, E)  bf16   diag(Dv^-1) * H * diag(w_edge)
    w_y = wy_ref[...]     # (C, C)      bf16   folded conv+BN weight (y half), transposed
    w_e = we_ref[...]     # (C, C)      bf16   folded conv+BN weight (ef half), transposed
    b = b_ref[...]        # (1, C)      f32    folded conv+BN bias

    # ef0 = (H De^-1)^T @ x   (contract N, batched over Bt), f32 MXU accumulation.
    ef0 = lax.dot_general(h1, x,
                          dimension_numbers=(((1,), (1,)), ((0,), (0,))),
                          preferred_element_type=jnp.float32)          # (Bt, E, C)

    # Split 1x1 conv (+ folded BN): y @ Wy^T + ef0 @ We^T + b.
    # Both dots are non-batched contractions -> flatten to (Bt*E, C) @ (C, C);
    # the y-dot has no dependency on ef0 and can overlap the first matmul.
    conv = lax.dot_general(y, w_y,
                           dimension_numbers=(((2,), (0,)), ((), ())),
                           preferred_element_type=jnp.float32)         # (Bt, E, C)
    conv = conv + lax.dot_general(ef0.astype(jnp.bfloat16), w_e,
                                  dimension_numbers=(((2,), (0,)), ((), ())),
                                  preferred_element_type=jnp.float32)
    ef = conv + b
    ef = jnp.where(ef >= 0, ef, 0.2 * ef)                              # LeakyReLU(0.2)

    # feature = (Dv^-1 H diag(w_edge)) @ ef   (contract E, batched over Bt).
    feat = lax.dot_general(h2, ef.astype(jnp.bfloat16),
                           dimension_numbers=(((2,), (1,)), ((0,), (0,))),
                           preferred_element_type=jnp.float32)         # (Bt, N, C)

    edge_ref[...] = ef.astype(edge_ref.dtype)
    feat_ref[...] = feat.astype(feat_ref.dtype)


def _pick_block_batch(bs, N, E, C, out_bytes, vmem_budget_bytes=8 * 1024 * 1024):
    """Size batches-per-grid-step from a per-step VMEM footprint budget."""
    per_batch = (2 * (N * C + E * C + 2 * N * E)        # bf16 inputs
                 + out_bytes * (N * C + E * C))          # outputs
    cap = max(1, vmem_budget_bytes // (2 * per_batch))   # x2: double-buffered blocks
    cap = min(cap, 16)                                   # bound live f32 intermediates
    if bs >= 2:
        cap = min(cap, bs // 2)                          # keep >= 2 grid steps (v7x: 2 TCs)
    cap = max(cap, 1)
    divisors = [d for d in range(1, bs + 1) if bs % d == 0 and d <= cap]
    # Prefer an even number of grid steps (balanced across 2 TensorCores), then largest Bt.
    return max(divisors, key=lambda d: ((bs // d) % 2 == 0, d))


def feature_aggregation_mean(x, y, H, De_n_1, Dv_n_1, W_edge,
                             conv_w, conv_b, bn_gamma, bn_beta, bn_mean, bn_var,
                             eps=1e-5, block_batch=None, out_dtype=jnp.bfloat16):
    """x:(bs,C,N) y:(bs,C,E) H:(bs,N,E) De:(bs,E,E) Dv:(bs,N,N) W_edge:(bs,E,1).

    Returns (feature (bs,C,N), edge_feature (bs,C,E)) like the PyTorch module.
    NOTE: only the diagonals of De_n_1 / Dv_n_1 are used (assumed diagonal).
    """
    bs, C, N = x.shape
    E = H.shape[2]
    out_bytes = jnp.dtype(out_dtype).itemsize

    if block_batch is None:
        block_batch = _pick_block_batch(bs, N, E, C, out_bytes)
    Bt = block_batch
    assert bs % Bt == 0, "block_batch must divide batch size"

    # ---- wrapper-side glue (plain XLA, fuses with casts) ----------------------
    # Fold eval-mode BatchNorm1d into the 1x1 conv and split the weight in two.
    scale = bn_gamma / jnp.sqrt(bn_var + eps)                  # (C,)
    w_eff = conv_w * scale[:, None]                            # (C, 2C)
    b_eff = (conv_b - bn_mean) * scale + bn_beta               # (C,)
    w_y_t = jnp.transpose(w_eff[:, :C]).astype(jnp.bfloat16)   # (C, C)  for y @ Wy^T
    w_e_t = jnp.transpose(w_eff[:, C:]).astype(jnp.bfloat16)   # (C, C)  for ef @ We^T
    b_row = b_eff[None, :].astype(jnp.float32)                 # (1, C)

    # bf16 MXU operands, channel-last for lane-dense (C=128) tiles.
    x_nc = jnp.transpose(x, (0, 2, 1)).astype(jnp.bfloat16)    # (bs, N, C)
    y_ec = jnp.transpose(y, (0, 2, 1)).astype(jnp.bfloat16)    # (bs, E, C)

    # Fold the diagonal scalings into two pre-scaled copies of H.
    de_vec = jnp.diagonal(De_n_1, axis1=1, axis2=2)            # (bs, E)
    dv_vec = jnp.diagonal(Dv_n_1, axis1=1, axis2=2)            # (bs, N)
    we_vec = W_edge[..., 0]                                    # (bs, E)
    h1 = (H * de_vec[:, None, :]).astype(jnp.bfloat16)                         # (bs, N, E)
    h2 = (dv_vec[:, :, None] * H * we_vec[:, None, :]).astype(jnp.bfloat16)    # (bs, N, E)

    feat_nc, edge_ec = pl.pallas_call(
        _fal_kernel,
        out_shape=(jax.ShapeDtypeStruct((bs, N, C), out_dtype),
                   jax.ShapeDtypeStruct((bs, E, C), out_dtype)),
        grid_spec=pltpu.PrefetchScalarGridSpec(
            num_scalar_prefetch=0,
            grid=(bs // Bt,),
            in_specs=[
                pl.BlockSpec((Bt, N, C), lambda g: (g, 0, 0)),   # x  (N,C)  bf16
                pl.BlockSpec((Bt, E, C), lambda g: (g, 0, 0)),   # y  (E,C)  bf16
                pl.BlockSpec((Bt, N, E), lambda g: (g, 0, 0)),   # H1        bf16
                pl.BlockSpec((Bt, N, E), lambda g: (g, 0, 0)),   # H2        bf16
                pl.BlockSpec((C, C), lambda g: (0, 0)),          # Wy^T      bf16
                pl.BlockSpec((C, C), lambda g: (0, 0)),          # We^T      bf16
                pl.BlockSpec((1, C), lambda g: (0, 0)),          # folded bias
            ],
            out_specs=[
                pl.BlockSpec((Bt, N, C), lambda g: (g, 0, 0)),
                pl.BlockSpec((Bt, E, C), lambda g: (g, 0, 0)),
            ],
        ),
        compiler_params=pltpu.CompilerParams(
            dimension_semantics=("parallel",),
            vmem_limit_bytes=32 * 1024 * 1024),
    )(x_nc, y_ec, h1, h2, w_y_t, w_e_t, b_row)

    # Back to PyTorch output layout: feature (bs,C,N), edge_feature (bs,C,E).
    return jnp.transpose(feat_nc, (0, 2, 1)), jnp.transpose(edge_ec, (0, 2, 1))


def _reference(x, y, H, De, Dv, W_edge, conv_w, conv_b, g, beta, m, v, eps=1e-5):
    """Pure-JAX f32 replica of the PyTorch 'mean' branch (BN in eval mode)."""
    feature = jnp.transpose(x, (0, 2, 1))                       # (bs,N,C)
    feature = jnp.einsum('bne,bnc->bec', H, feature)            # H^T @ f
    edge = jnp.einsum('bef,bfc->bec', De, feature)              # De^-1 @ f
    cat = jnp.concatenate([y, jnp.transpose(edge, (0, 2, 1))], axis=1)  # (bs,2C,E)
    out = jnp.einsum('cj,bje->bce', conv_w, cat) + conv_b[None, :, None]
    scale = g / jnp.sqrt(v + eps)
    out = (out - m[None, :, None]) * scale[None, :, None] + beta[None, :, None]
    out = jnp.where(out >= 0, out, 0.2 * out)
    edge = jnp.transpose(out, (0, 2, 1))                        # (bs,E,C)
    f = W_edge * edge
    f = jnp.einsum('bne,bec->bnc', H, f)
    f = jnp.einsum('bnm,bmc->bnc', Dv, f)
    return jnp.transpose(f, (0, 2, 1)), jnp.transpose(edge, (0, 2, 1))


if __name__ == "__main__":
    key = jax.random.PRNGKey(0)
    # Module default num_channels=128 -> lane-dense (128-wide) kernel blocks.
    bs, C, N, E = 4, 128, 64, 32        # batch, channels, num_points, num_edges
    ks = jax.random.split(key, 10)

    x = jax.random.normal(ks[0], (bs, C, N), jnp.float32)
    y = jax.random.normal(ks[1], (bs, C, E), jnp.float32)

    # Synthetic hypergraph incidence + inverse-degree diagonal matrices.
    Hinc = (jax.random.uniform(ks[2], (bs, N, E)) < 0.5).astype(jnp.float32)
    De_n_1 = jax.vmap(jnp.diag)(1.0 / jnp.maximum(Hinc.sum(axis=1), 1.0))   # (bs,E,E)
    Dv_n_1 = jax.vmap(jnp.diag)(1.0 / jnp.maximum(Hinc.sum(axis=2), 1.0))   # (bs,N,N)
    W_edge = jax.random.uniform(ks[3], (bs, E, 1), jnp.float32)

    # Deterministic synthetic params: Conv1d(2C -> C, k=1) + BatchNorm1d(C) (eval).
    conv_w = 0.05 * jax.random.normal(ks[4], (C, 2 * C), jnp.float32)
    conv_b = 0.05 * jax.random.normal(ks[5], (C,), jnp.float32)
    bn_gamma = 1.0 + 0.1 * jax.random.normal(ks[6], (C,), jnp.float32)
    bn_beta = 0.1 * jax.random.normal(ks[7], (C,), jnp.float32)
    bn_mean = 0.1 * jax.random.normal(ks[8], (C,), jnp.float32)
    bn_var = 1.0 + 0.1 * jnp.abs(jax.random.normal(ks[9], (C,), jnp.float32))

    # NOTE: forward args W and k are unused in the 'mean' branch of the module.

    feat, edge = feature_aggregation_mean(
        x, y, Hinc, De_n_1, Dv_n_1, W_edge,
        conv_w, conv_b, bn_gamma, bn_beta, bn_mean, bn_var)
    jax.block_until_ready((feat, edge))

    ref_feat, ref_edge = _reference(
        x, y, Hinc, De_n_1, Dv_n_1, W_edge,
        conv_w, conv_b, bn_gamma, bn_beta, bn_mean, bn_var)
    assert feat.shape == (bs, C, N) and edge.shape == (bs, C, E)
    # bf16 MXU operands / bf16 outputs with f32 accumulation -> compare against
    # the f32 reference at mixed-precision tolerance.
    assert jnp.allclose(feat.astype(jnp.float32), ref_feat, rtol=3e-2, atol=3e-2)
    assert jnp.allclose(edge.astype(jnp.float32), ref_edge, rtol=3e-2, atol=3e-2)

    print("KERNEL_OK")
</pallas_src>

<mosaic_0001>
module attributes {stable_mosaic.version = 11 : i64} {
  func.func @_fal_kernel(%arg0: i32, %arg1: memref<2x64x128xbf16, #tpu.memory_space<vmem>>, %arg2: memref<2x32x128xbf16, #tpu.memory_space<vmem>>, %arg3: memref<2x64x32xbf16, #tpu.memory_space<vmem>>, %arg4: memref<2x64x32xbf16, #tpu.memory_space<vmem>>, %arg5: memref<128x128xbf16, #tpu.memory_space<vmem>>, %arg6: memref<128x128xbf16, #tpu.memory_space<vmem>>, %arg7: memref<1x128xf32, #tpu.memory_space<vmem>>, %arg8: memref<2x64x128xbf16, #tpu.memory_space<vmem>>, %arg9: memref<2x32x128xbf16, #tpu.memory_space<vmem>>) attributes {dimension_semantics = [#tpu.dimension_semantics<parallel>], iteration_bounds = array<i64: 2>, scalar_prefetch = 0 : i64, scratch_operands = 0 : i64, tpu.core_type = #tpu.core_type<tc>, window_params = [{transform_indices = @transform_0, window_bounds = array<i64: 2, 64, 128>}, {transform_indices = @transform_1, window_bounds = array<i64: 2, 32, 128>}, {transform_indices = @transform_2, window_bounds = array<i64: 2, 64, 32>}, {transform_indices = @transform_3, window_bounds = array<i64: 2, 64, 32>}, {pipeline_mode = #tpu.pipeline_mode<synchronous>, transform_indices = @transform_4, window_bounds = array<i64: 128, 128>}, {pipeline_mode = #tpu.pipeline_mode<synchronous>, transform_indices = @transform_5, window_bounds = array<i64: 128, 128>}, {pipeline_mode = #tpu.pipeline_mode<synchronous>, transform_indices = @transform_6, window_bounds = array<i64: 1, 128>}, {transform_indices = @transform_7, window_bounds = array<i64: 2, 64, 128>}, {transform_indices = @transform_8, window_bounds = array<i64: 2, 32, 128>}]} {
    %c0 = arith.constant 0 : index
    %c0_0 = arith.constant 0 : index
    %c0_1 = arith.constant 0 : index
    %0 = vector.load %arg1[%c0, %c0_0, %c0_1] : memref<2x64x128xbf16, #tpu.memory_space<vmem>>, vector<2x64x128xbf16>
    %c0_2 = arith.constant 0 : index
    %c0_3 = arith.constant 0 : index
    %c0_4 = arith.constant 0 : index
    %1 = vector.load %arg2[%c0_2, %c0_3, %c0_4] : memref<2x32x128xbf16, #tpu.memory_space<vmem>>, vector<2x32x128xbf16>
    %c0_5 = arith.constant 0 : index
    %c0_6 = arith.constant 0 : index
    %c0_7 = arith.constant 0 : index
    %2 = vector.load %arg3[%c0_5, %c0_6, %c0_7] : memref<2x64x32xbf16, #tpu.memory_space<vmem>>, vector<2x64x32xbf16>
    %c0_8 = arith.constant 0 : index
    %c0_9 = arith.constant 0 : index
    %c0_10 = arith.constant 0 : index
    %3 = vector.load %arg4[%c0_8, %c0_9, %c0_10] : memref<2x64x32xbf16, #tpu.memory_space<vmem>>, vector<2x64x32xbf16>
    %c0_11 = arith.constant 0 : index
    %c0_12 = arith.constant 0 : index
    %4 = vector.load %arg5[%c0_11, %c0_12] : memref<128x128xbf16, #tpu.memory_space<vmem>>, vector<128x128xbf16>
    %c0_13 = arith.constant 0 : index
    %c0_14 = arith.constant 0 : index
    %5 = vector.load %arg6[%c0_13, %c0_14] : memref<128x128xbf16, #tpu.memory_space<vmem>>, vector<128x128xbf16>
    %c0_15 = arith.constant 0 : index
    %c0_16 = arith.constant 0 : index
    %6 = vector.load %arg7[%c0_15, %c0_16] : memref<1x128xf32, #tpu.memory_space<vmem>>, vector<1x128xf32>
    %cst = arith.constant dense<0.000000e+00> : vector<2x32x128xf32>
    %7 = tpu.matmul %2, %0, %cst {dimension_numbers = #tpu.dot_dimension_numbers<[1], [1], [2], [2], [0, 0, 0, 2, 1, 2], [0], [0]>} : vector<2x64x32xbf16>, vector<2x64x128xbf16>, vector<2x32x128xf32> -> vector<2x32x128xf32>
    %cst_17 = arith.constant dense<0.000000e+00> : vector<2x32x128xf32>
    %8 = tpu.matmul %1, %4, %cst_17 {dimension_numbers = #tpu.dot_dimension_numbers<[2], [0], [0, 1], [1], [0, 0, 0, 1, 1, 1], [], []>} : vector<2x32x128xbf16>, vector<128x128xbf16>, vector<2x32x128xf32> -> vector<2x32x128xf32>
    %9 = arith.truncf %7 : vector<2x32x128xf32> to vector<2x32x128xbf16>
    %cst_18 = arith.constant dense<0.000000e+00> : vector<2x32x128xf32>
    %10 = tpu.matmul %9, %5, %cst_18 {dimension_numbers = #tpu.dot_dimension_numbers<[2], [0], [0, 1], [1], [0, 0, 0, 1, 1, 1], [], []>} : vector<2x32x128xbf16>, vector<128x128xbf16>, vector<2x32x128xf32> -> vector<2x32x128xf32>
    %11 = arith.addf %8, %10 : vector<2x32x128xf32>
    %12 = vector.shape_cast %6 : vector<1x128xf32> to vector<1x1x128xf32>
    %13 = vector.broadcast %12 : vector<1x1x128xf32> to vector<2x32x128xf32>
    %14 = arith.addf %11, %13 : vector<2x32x128xf32>
    %cst_19 = arith.constant 0.000000e+00 : f32
    %15 = vector.broadcast %cst_19 : f32 to vector<2x32x128xf32>
    %16 = arith.cmpf oge, %14, %15 : vector<2x32x128xf32>
    %cst_20 = arith.constant 2.000000e-01 : f32
    %17 = vector.broadcast %cst_20 : f32 to vector<2x32x128xf32>
    %18 = arith.mulf %17, %14 : vector<2x32x128xf32>
    %19 = arith.select %16, %14, %18 : vector<2x32x128xi1>, vector<2x32x128xf32>
    %20 = arith.truncf %19 : vector<2x32x128xf32> to vector<2x32x128xbf16>
    %cst_21 = arith.constant dense<0.000000e+00> : vector<2x64x128xf32>
    %21 = tpu.matmul %3, %20, %cst_21 {dimension_numbers = #tpu.dot_dimension_numbers<[2], [1], [1], [2], [0, 0, 0, 1, 1, 2], [0], [0]>} : vector<2x64x32xbf16>, vector<2x32x128xbf16>, vector<2x64x128xf32> -> vector<2x64x128xf32>
    %22 = arith.truncf %19 : vector<2x32x128xf32> to vector<2x32x128xbf16>
    %c0_22 = arith.constant 0 : index
    %c0_23 = arith.constant 0 : index
    %c0_24 = arith.constant 0 : index
    %23 = vector.load %arg9[%c0_22, %c0_23, %c0_24] : memref<2x32x128xbf16, #tpu.memory_space<vmem>>, vector<2x32x128xbf16>
    tpu.vector_store %arg9[%c0_22, %c0_23, %c0_24], %22 {strides = array<i32>} : memref<2x32x128xbf16, #tpu.memory_space<vmem>>, vector<2x32x128xbf16>,
    %24 = arith.truncf %21 : vector<2x64x128xf32> to vector<2x64x128xbf16>
    %c0_25 = arith.constant 0 : index
    %c0_26 = arith.constant 0 : index
    %c0_27 = arith.constant 0 : index
    %25 = vector.load %arg8[%c0_25, %c0_26, %c0_27] : memref<2x64x128xbf16, #tpu.memory_space<vmem>>, vector<2x64x128xbf16>
    tpu.vector_store %arg8[%c0_25, %c0_26, %c0_27], %24 {strides = array<i32>} : memref<2x64x128xbf16, #tpu.memory_space<vmem>>, vector<2x64x128xbf16>,
    return
  }
  func.func @transform_0(%arg0: i32) -> (i32, i32, i32) {
    %c0_i32 = arith.constant 0 : i32
    %c0_i32_0 = arith.constant 0 : i32
    %c0_i32_1 = arith.constant 0 : i32
    return %arg0, %c0_i32, %c0_i32_0 : i32, i32, i32
  }
  func.func @transform_1(%arg0: i32) -> (i32, i32, i32) {
    %c0_i32 = arith.constant 0 : i32
    %c0_i32_0 = arith.constant 0 : i32
    %c0_i32_1 = arith.constant 0 : i32
    return %arg0, %c0_i32, %c0_i32_0 : i32, i32, i32
  }
  func.func @transform_2(%arg0: i32) -> (i32, i32, i32) {
    %c0_i32 = arith.constant 0 : i32
    %c0_i32_0 = arith.constant 0 : i32
    %c0_i32_1 = arith.constant 0 : i32
    return %arg0, %c0_i32, %c0_i32_0 : i32, i32, i32
  }
  func.func @transform_3(%arg0: i32) -> (i32, i32, i32) {
    %c0_i32 = arith.constant 0 : i32
    %c0_i32_0 = arith.constant 0 : i32
    %c0_i32_1 = arith.constant 0 : i32
    return %arg0, %c0_i32, %c0_i32_0 : i32, i32, i32
  }
  func.func @transform_4(%arg0: i32) -> (i32, i32) {
    %c0_i32 = arith.constant 0 : i32
    %c0_i32_0 = arith.constant 0 : i32
    %c0_i32_1 = arith.constant 0 : i32
    return %c0_i32, %c0_i32_0 : i32, i32
  }
  func.func @transform_5(%arg0: i32) -> (i32, i32) {
    %c0_i32 = arith.constant 0 : i32
    %c0_i32_0 = arith.constant 0 : i32
    %c0_i32_1 = arith.constant 0 : i32
    return %c0_i32, %c0_i32_0 : i32, i32
  }
  func.func @transform_6(%arg0: i32) -> (i32, i32) {
    %c0_i32 = arith.constant 0 : i32
    %c0_i32_0 = arith.constant 0 : i32
    %c0_i32_1 = arith.constant 0 : i32
    return %c0_i32, %c0_i32_0 : i32, i32
  }
  func.func @transform_7(%arg0: i32) -> (i32, i32, i32) {
    %c0_i32 = arith.constant 0 : i32
    %c0_i32_0 = arith.constant 0 : i32
    %c0_i32_1 = arith.constant 0 : i32
    return %arg0, %c0_i32, %c0_i32_0 : i32, i32, i32
  }
  func.func @transform_8(%arg0: i32) -> (i32, i32, i32) {
    %c0_i32 = arith.constant 0 : i32
    %c0_i32_0 = arith.constant 0 : i32
    %c0_i32_1 = arith.constant 0 : i32
    return %arg0, %c0_i32, %c0_i32_0 : i32, i32, i32
  }
}

</mosaic_0001>

<llo_original>
// kernel: tpu_custom_call.1
$region0: #{tpu_custom_call.1}
  #allocation0 [shape = 'u32[]', space=smem, size = 0x4, offset = 0x4, fixed_abs, tag = 'smem constant byte address 0x4 - core index']
  #allocation1 [shape = 'u32[144,128]{1,0:T(1,128)}', space=vmem, size = 0x12000, scoped, tag = 'internal scratch']
  %s0 = inlined_call_operand.vmem [shape: bf16[4,64,128], index: 0, kind: input, shape index: {}]
  %s1 = inlined_call_operand.vmem [shape: bf16[4,32,128], index: 1, kind: input, shape index: {}]
  %s2 = inlined_call_operand.vmem [shape: bf16[4,64,32], index: 2, kind: input, shape index: {}]
  %s3 = inlined_call_operand.vmem [shape: bf16[4,64,32], index: 3, kind: input, shape index: {}]
  %s4 = inlined_call_operand.vmem [shape: bf16[128,128], index: 4, kind: input, shape index: {}]
  %s5 = inlined_call_operand.vmem [shape: bf16[128,128], index: 5, kind: input, shape index: {}]
  %s6 = inlined_call_operand.vmem [shape: f32[1,128], index: 6, kind: input, shape index: {}]
  %s7 = inlined_call_operand.hbm [shape: bf16[4,64,128], index: 7, kind: output, shape index: {0}]
  %s8 = inlined_call_operand.hbm [shape: bf16[4,32,128], index: 8, kind: output, shape index: {1}]
  %9 = xla_tuple %s7, %s8
  %s10 = sld [smem:[#allocation0]]
  $region69: #{tpu_custom_call.1} parent=0
    _
  %s12 = ssub.s32 1, %s10
  %s13 = scalar_select 0, %s12, %s10
  $region1: #{tpu_custom_call.1} parent=0
    #allocation2 [shape = 'u8[65536]{0}', space=vmem, size = 0x10000, scoped, tag = 'output window, operand 0']
    #allocation3 [shape = 's32[2]{0}', space=sflag, size = 0x8, scoped, tag = 'scoped memory for tpu_custom_call.1']
    #allocation4 [shape = 'u8[32768]{0}', space=vmem, size = 0x8000, scoped, tag = 'output window, operand 1']
    #allocation5 [shape = 's32[2]{0}', space=sflag, size = 0x8, scoped, tag = 'scoped memory for tpu_custom_call.1']
    %14 = vsyncpa [#allocation3], 0
    %s15 = scalar_lea.sflag [#allocation3], 1
    %16 = vsyncpa %s15, 0
    %17 = vsyncpa [#allocation5], 0
    %s18 = scalar_lea.sflag [#allocation5], 1
    %19 = vsyncpa %s18, 0
    loop: start=0, step=1, limit=4
    $region2: #{tpu_custom_call.1} parent=1 // loop_pre_header
      _
    $region3: #{tpu_custom_call.1} parent=1 // loop_header
      %s21 = sphi 0, %s25
      %p22 = scmp.ge.s32.totalorder %s21, 4
      %s31 = sphi 0, %s33
      %s34 = sphi 0, %s31
      %s35 = sphi 0, %s34
      %s51 = sphi 0, %s35
      %s57 = sphi 0, %s59
      %s60 = sphi 0, %s57
      %s61 = sphi 0, %s60
      %s77 = sphi 0, %s61
      %s83 = sphi 0, %s85
      %s86 = sphi 0, %s83
      %s87 = sphi 0, %s86
      %s103 = sphi 0, %s87
      %s109 = sphi 0, %s111
      %s112 = sphi 0, %s109
      %s113 = sphi 0, %s112
      %s129 = sphi 0, %s113
      %s133 = sphi 0, %s133
      %s135 = sphi 0, %s133
      %s136 = sphi 0, %s135
      %s150 = sphi 0, %s136
      %s154 = sphi 0, %s154
      %s156 = sphi 0, %s154
      %s157 = sphi 0, %s156
      %s171 = sphi 0, %s157
      %s175 = sphi 0, %s175
      %s177 = sphi 0, %s175
      %s178 = sphi 0, %s177
      %s192 = sphi 0, %s178
      %s198 = sphi 0, %s200
      %s201 = sphi 0, %s198
      %s202 = sphi 0, %s201
      %s218 = sphi 0, %s202
      %s224 = sphi 0, %s226
      %s227 = sphi 0, %s224
      %s228 = sphi 0, %s227
      %s244 = sphi 0, %s228
    $region4: #{tpu_custom_call.1} parent=1 // loop_header_branch
      %24 = sbr.rel (%p22) target = $region8
    $region5: #{tpu_custom_call.1} parent=1 // loop_body
      %s26 = ssub.s32 %s21, 1
      %s27 = ssub.s32 %s21, 2
      %s28 = sadd.s32 %s21, 1
      %s29 = ssub.s32 %s21, %s28
      %p30 = scmp.eq.s32.totalorder %s29, 0
      %s32 = sadd.s32 %s31, 1
      %s33 = scalar_select %p30, %s31, %s32
      %p36 = pneg %p30
      %p37 = scmp.eq.s32.totalorder %s21, 1
      %p38 = por %p36, %p37
      %p39 = scmp.ne.s32.totalorder %s31, %s34
      %p40 = scmp.eq.s32.totalorder %s21, 0
      %p41 = por %p39, %p40
      %p42 = scmp.ne.s32.totalorder %s31, %s34
      %p43 = scmp.eq.s32.totalorder %s26, 1
      %p44 = por %p42, %p43
      %p45 = scmp.ne.s32.totalorder %s34, %s35
      %p46 = scmp.eq.s32.totalorder %s26, 0
      %p47 = por %p45, %p46
      %p48 = scmp.ne.s32.totalorder %s34, %s35
      %p49 = scmp.eq.s32.totalorder %s27, 1
      %p50 = por %p48, %p49
      %p52 = scmp.ne.s32.totalorder %s35, %s51
      %p53 = scmp.eq.s32.totalorder %s27, 0
      %p54 = por %p52, %p53
      %s55 = ssub.s32 %s21, %s28
      %p56 = scmp.eq.s32.totalorder %s55, 0
      %s58 = sadd.s32 %s57, 1
      %s59 = scalar_select %p56, %s57, %s58
      %p62 = pneg %p56
      %p63 = scmp.eq.s32.totalorder %s21, 1
      %p64 = por %p62, %p63
      %p65 = scmp.ne.s32.totalorder %s57, %s60
      %p66 = scmp.eq.s32.totalorder %s21, 0
      %p67 = por %p65, %p66
      %p68 = scmp.ne.s32.totalorder %s57, %s60
      %p69 = scmp.eq.s32.totalorder %s26, 1
      %p70 = por %p68, %p69
      %p71 = scmp.ne.s32.totalorder %s60, %s61
      %p72 = scmp.eq.s32.totalorder %s26, 0
      %p73 = por %p71, %p72
      %p74 = scmp.ne.s32.totalorder %s60, %s61
      %p75 = scmp.eq.s32.totalorder %s27, 1
      %p76 = por %p74, %p75
      %p78 = scmp.ne.s32.totalorder %s61, %s77
      %p79 = scmp.eq.s32.totalorder %s27, 0
      %p80 = por %p78, %p79
      %s81 = ssub.s32 %s21, %s28
      %p82 = scmp.eq.s32.totalorder %s81, 0
      %s84 = sadd.s32 %s83, 1
      %s85 = scalar_select %p82, %s83, %s84
      %p88 = pneg %p82
      %p89 = scmp.eq.s32.totalorder %s21, 1
      %p90 = por %p88, %p89
      %p91 = scmp.ne.s32.totalorder %s83, %s86
      %p92 = scmp.eq.s32.totalorder %s21, 0
      %p93 = por %p91, %p92
      %p94 = scmp.ne.s32.totalorder %s83, %s86
      %p95 = scmp.eq.s32.totalorder %s26, 1
      %p96 = por %p94, %p95
      %p97 = scmp.ne.s32.totalorder %s86, %s87
      %p98 = scmp.eq.s32.totalorder %s26, 0
      %p99 = por %p97, %p98
      %p100 = scmp.ne.s32.totalorder %s86, %s87
      %p101 = scmp.eq.s32.totalorder %s27, 1
      %p102 = por %p100, %p101
      %p104 = scmp.ne.s32.totalorder %s87, %s103
      %p105 = scmp.eq.s32.totalorder %s27, 0
      %p106 = por %p104, %p105
      %s107 = ssub.s32 %s21, %s28
      %p108 = scmp.eq.s32.totalorder %s107, 0
      %s110 = sadd.s32 %s109, 1
      %s111 = scalar_select %p108, %s109, %s110
      %p114 = pneg %p108
      %p115 = scmp.eq.s32.totalorder %s21, 1
      %p116 = por %p114, %p115
      %p117 = scmp.ne.s32.totalorder %s109, %s112
      %p118 = scmp.eq.s32.totalorder %s21, 0
      %p119 = por %p117, %p118
      %p120 = scmp.ne.s32.totalorder %s109, %s112
      %p121 = scmp.eq.s32.totalorder %s26, 1
      %p122 = por %p120, %p121
      %p123 = scmp.ne.s32.totalorder %s112, %s113
      %p124 = scmp.eq.s32.totalorder %s26, 0
      %p125 = por %p123, %p124
      %p126 = scmp.ne.s32.totalorder %s112, %s113
      %p127 = scmp.eq.s32.totalorder %s27, 1
      %p128 = por %p126, %p127
      %p130 = scmp.ne.s32.totalorder %s113, %s129
      %p131 = scmp.eq.s32.totalorder %s27, 0
      %p132 = por %p130, %p131
      %s134 = sadd.s32 %s133, 1
      %p137 = scmp.eq.s32.totalorder %s21, 1
      %p138 = scmp.ne.s32.totalorder %s133, %s135
      %p139 = scmp.eq.s32.totalorder %s21, 0
      %p140 = por %p138, %p139
      %p141 = scmp.ne.s32.totalorder %s133, %s135
      %p142 = scmp.eq.s32.totalorder %s26, 1
      %p143 = por %p141, %p142
      %p144 = scmp.ne.s32.totalorder %s135, %s136
      %p145 = scmp.eq.s32.totalorder %s26, 0
      %p146 = por %p144, %p145
      %p147 = scmp.ne.s32.totalorder %s135, %s136
      %p148 = scmp.eq.s32.totalorder %s27, 1
      %p149 = por %p147, %p148
      %p151 = scmp.ne.s32.totalorder %s136, %s150
      %p152 = scmp.eq.s32.totalorder %s27, 0
      %p153 = por %p151, %p152
      %s155 = sadd.s32 %s154, 1
      %p158 = scmp.eq.s32.totalorder %s21, 1
      %p159 = scmp.ne.s32.totalorder %s154, %s156
      %p160 = scmp.eq.s32.totalorder %s21, 0
      %p161 = por %p159, %p160
      %p162 = scmp.ne.s32.totalorder %s154, %s156
      %p163 = scmp.eq.s32.totalorder %s26, 1
      %p164 = por %p162, %p163
      %p165 = scmp.ne.s32.totalorder %s156, %s157
      %p166 = scmp.eq.s32.totalorder %s26, 0
      %p167 = por %p165, %p166
      %p168 = scmp.ne.s32.totalorder %s156, %s157
      %p169 = scmp.eq.s32.totalorder %s27, 1
      %p170 = por %p168, %p169
      %p172 = scmp.ne.s32.totalorder %s157, %s171
      %p173 = scmp.eq.s32.totalorder %s27, 0
      %p174 = por %p172, %p173
      %s176 = sadd.s32 %s175, 1
      %p179 = scmp.eq.s32.totalorder %s21, 1
      %p180 = scmp.ne.s32.totalorder %s175, %s177
      %p181 = scmp.eq.s32.totalorder %s21, 0
      %p182 = por %p180, %p181
      %p183 = scmp.ne.s32.totalorder %s175, %s177
      %p184 = scmp.eq.s32.totalorder %s26, 1
      %p185 = por %p183, %p184
      %p186 = scmp.ne.s32.totalorder %s177, %s178
      %p187 = scmp.eq.s32.totalorder %s26, 0
      %p188 = por %p186, %p187
      %p189 = scmp.ne.s32.totalorder %s177, %s178
      %p190 = scmp.eq.s32.totalorder %s27, 1
      %p191 = por %p189, %p190
      %p193 = scmp.ne.s32.totalorder %s178, %s192
      %p194 = scmp.eq.s32.totalorder %s27, 0
      %p195 = por %p193, %p194
      %s196 = ssub.s32 %s21, %s28
      %p197 = scmp.eq.s32.totalorder %s196, 0
      %s199 = sadd.s32 %s198, 1
      %s200 = scalar_select %p197, %s198, %s199
      %p203 = pneg %p197
      %p204 = scmp.eq.s32.totalorder %s21, 1
      %p205 = por %p203, %p204
      %p206 = scmp.ne.s32.totalorder %s198, %s201
      %p207 = scmp.eq.s32.totalorder %s21, 0
      %p208 = por %p206, %p207
      %p209 = scmp.ne.s32.totalorder %s198, %s201
      %p210 = scmp.eq.s32.totalorder %s26, 1
      %p211 = por %p209, %p210
      %p212 = scmp.ne.s32.totalorder %s201, %s202
      %p213 = scmp.eq.s32.totalorder %s26, 0
      %p214 = por %p212, %p213
      %p215 = scmp.ne.s32.totalorder %s201, %s202
      %p216 = scmp.eq.s32.totalorder %s27, 1
      %p217 = por %p215, %p216
      %p219 = scmp.ne.s32.totalorder %s202, %s218
      %p220 = scmp.eq.s32.totalorder %s27, 0
      %p221 = por %p219, %p220
      %s222 = ssub.s32 %s21, %s28
      %p223 = scmp.eq.s32.totalorder %s222, 0
      %s225 = sadd.s32 %s224, 1
      %s226 = scalar_select %p223, %s224, %s225
      %p229 = pneg %p223
      %p230 = scmp.eq.s32.totalorder %s21, 1
      %p231 = por %p229, %p230
      %p232 = scmp.ne.s32.totalorder %s224, %s227
      %p233 = scmp.eq.s32.totalorder %s21, 0
      %p234 = por %p232, %p233
      %p235 = scmp.ne.s32.totalorder %s224, %s227
      %p236 = scmp.eq.s32.totalorder %s26, 1
      %p237 = por %p235, %p236
      %p238 = scmp.ne.s32.totalorder %s227, %s228
      %p239 = scmp.eq.s32.totalorder %s26, 0
      %p240 = por %p238, %p239
      %p241 = scmp.ne.s32.totalorder %s227, %s228
      %p242 = scmp.eq.s32.totalorder %s27, 1
      %p243 = por %p241, %p242
      %p245 = scmp.ne.s32.totalorder %s228, %s244
      %p246 = scmp.eq.s32.totalorder %s27, 0
      %p247 = por %p245, %p246
      %p248 = scmp.le.s32.totalorder 1, %s21
      %p249 = scmp.lt.s32.totalorder %s21, 3
      %p250 = pnand %p248, %p249
      %p251 = pneg %p250
      // Predicated region
      $region9: #{tpu_custom_call.1} parent=5 // pred_check
        _
      $region10: #{tpu_custom_call.1} parent=5 // pred_check_branch
        %253 = sbr.rel (%p250) target = $region12
      $region11: #{tpu_custom_call.1} parent=5 // pred_region
        %s254 = ssub.s32 %s21, 1
        // Predicated region
        $region13: #{tpu_custom_call.1} parent=11 // pred_check
          %p255 = pneg %p146
        $region14: #{tpu_custom_call.1} parent=11 // pred_check_branch
          %257 = sbr.rel (%p255) target = $region16
        $region15: #{tpu_custom_call.1} parent=11 // pred_region
          _
        $region16: #{tpu_custom_call.1} parent=11 // pred_fallthru
          _
        // Predicated region
        $region17: #{tpu_custom_call.1} parent=11 // pred_check
          %p258 = pneg %p167
        $region18: #{tpu_custom_call.1} parent=11 // pred_check_branch
          %260 = sbr.rel (%p258) target = $region20
        $region19: #{tpu_custom_call.1} parent=11 // pred_region
          _
        $region20: #{tpu_custom_call.1} parent=11 // pred_fallthru
          _
        // Predicated region
        $region21: #{tpu_custom_call.1} parent=11 // pred_check
          %p261 = pneg %p188
        $region22: #{tpu_custom_call.1} parent=11 // pred_check_branch
          %263 = sbr.rel (%p261) target = $region24
        $region23: #{tpu_custom_call.1} parent=11 // pred_region
          _
        $region24: #{tpu_custom_call.1} parent=11 // pred_fallthru
          _
      $region12: #{tpu_custom_call.1} parent=5 // pred_fallthru
        _
      %p264 = scmp.lt.s32.totalorder %s21, 2
      // Predicated region
      $region25: #{tpu_custom_call.1} parent=5 // pred_check
        %p265 = pneg %p264
      $region26: #{tpu_custom_call.1} parent=5 // pred_check_branch
        %267 = sbr.rel (%p265) target = $region28
      $region27: #{tpu_custom_call.1} parent=5 // pred_region
        // Predicated region
        $region29: #{tpu_custom_call.1} parent=27 // pred_check
          %p268 = pneg %p41
        $region30: #{tpu_custom_call.1} parent=27 // pred_check_branch
          %270 = sbr.rel (%p268) target = $region32
        $region31: #{tpu_custom_call.1} parent=27 // pred_region
          %s271 = smul.u32 2, %s21
          %p272 = scmp.lt.s32.totalorder %s271, 3
          %s273 = scalar_select %p272, %s271, 3
          %s274 = smul.addr %s273, 8
          %s275 = smul.addr %s274, 4
          %s276 = scalar_lea.vmem %s0, %s275
          %s277 = smul.u32 2, %s21
        $region32: #{tpu_custom_call.1} parent=27 // pred_fallthru
          _
        // Predicated region
        $region33: #{tpu_custom_call.1} parent=27 // pred_check
          %p278 = pneg %p67
        $region34: #{tpu_custom_call.1} parent=27 // pred_check_branch
          %280 = sbr.rel (%p278) target = $region36
        $region35: #{tpu_custom_call.1} parent=27 // pred_region
          %s281 = smul.u32 2, %s21
          %p282 = scmp.lt.s32.totalorder %s281, 3
          %s283 = scalar_select %p282, %s281, 3
          %s284 = smul.addr %s283, 4
          %s285 = smul.addr %s284, 4
          %s286 = scalar_lea.vmem %s1, %s285
          %s287 = smul.u32 2, %s21
        $region36: #{tpu_custom_call.1} parent=27 // pred_fallthru
          _
        // Predicated region
        $region37: #{tpu_custom_call.1} parent=27 // pred_check
          %p288 = pneg %p93
        $region38: #{tpu_custom_call.1} parent=27 // pred_check_branch
          %290 = sbr.rel (%p288) target = $region40
        $region39: #{tpu_custom_call.1} parent=27 // pred_region
          %s291 = smul.u32 2, %s21
          %p292 = scmp.lt.s32.totalorder %s291, 3
          %s293 = scalar_select %p292, %s291, 3
          %s294 = smul.addr %s293, 8
          %s295 = smul.addr %s294, 4
          %s296 = scalar_lea.vmem %s2, %s295
          %s297 = smul.u32 2, %s21
        $region40: #{tpu_custom_call.1} parent=27 // pred_fallthru
          _
        // Predicated region
        $region41: #{tpu_custom_call.1} parent=27 // pred_check
          %p298 = pneg %p119
        $region42: #{tpu_custom_call.1} parent=27 // pred_check_branch
          %300 = sbr.rel (%p298) target = $region44
        $region43: #{tpu_custom_call.1} parent=27 // pred_region
          %s301 = smul.u32 2, %s21
          %p302 = scmp.lt.s32.totalorder %s301, 3
          %s303 = scalar_select %p302, %s301, 3
          %s304 = smul.addr %s303, 8
          %s305 = smul.addr %s304, 4
          %s306 = scalar_lea.vmem %s3, %s305
          %s307 = smul.u32 2, %s21
        $region44: #{tpu_custom_call.1} parent=27 // pred_fallthru
          _
      $region28: #{tpu_custom_call.1} parent=5 // pred_fallthru
        _
      %p308 = scmp.le.s32.totalorder 1, %s21
      %p309 = scmp.lt.s32.totalorder %s21, 3
      %p310 = pnand %p308, %p309
      %p311 = pneg %p310
      // Predicated region
      $region45: #{tpu_custom_call.1} parent=5 // pred_check
        _
      $region46: #{tpu_custom_call.1} parent=5 // pred_check_branch
        %313 = sbr.rel (%p310) target = $region48
      $region47: #{tpu_custom_call.1} parent=5 // pred_region
        %s314 = ssub.s32 %s21, 1
        %s315 = smul.u32 2, %s26
        %p316 = scmp.lt.s32.totalorder %s315, 3
        %s317 = scalar_select %p316, %s315, 3
        %s318 = smul.addr %s317, 8
        %s319 = smul.addr %s318, 4
        %s320 = scalar_lea.vmem %s0, %s319
        %p321 = pneg %p47
        %p322 = pneg %p44
        %s323 = smul.u32 2, %s26
        %p324 = scmp.lt.s32.totalorder %s323, 3
        %s325 = scalar_select %p324, %s323, 3
        %s326 = smul.addr %s325, 4
        %s327 = smul.addr %s326, 4
        %s328 = scalar_lea.vmem %s1, %s327
        %p329 = pneg %p73
        %p330 = pneg %p70
        %s331 = smul.u32 2, %s26
        %p332 = scmp.lt.s32.totalorder %s331, 3
        %s333 = scalar_select %p332, %s331, 3
        %s334 = smul.addr %s333, 8
        %s335 = smul.addr %s334, 4
        %s336 = scalar_lea.vmem %s2, %s335
        %p337 = pneg %p99
        %p338 = pneg %p96
        %s339 = smul.u32 2, %s26
        %p340 = scmp.lt.s32.totalorder %s339, 3
        %s341 = scalar_select %p340, %s339, 3
        %s342 = smul.addr %s341, 8
        %s343 = smul.addr %s342, 4
        %s344 = scalar_lea.vmem %s3, %s343
        %p345 = pneg %p125
        %p346 = pneg %p122
        %p347 = pneg %p146
        %p348 = pneg %p143
        %p349 = pneg %p167
        %p350 = pneg %p164
        %p351 = pneg %p188
        %p352 = pneg %p185
        %p353 = pneg %p214
        %p354 = pneg %p211
        %s355 = sand.u32 %s201, 1
        %s356 = scalar_lea.sflag [#allocation3], %s355
        %s357 = sand.u32 %s201, 1
        %s358 = smul.addr %s357, 64
        %s359 = scalar_lea.vmem [#allocation2], %s358
        %p360 = pneg %p240
        %p361 = pneg %p237
        %s362 = sand.u32 %s227, 1
        %s363 = scalar_lea.sflag [#allocation5], %s362
        %s364 = sand.u32 %s227, 1
        %s365 = smul.addr %s364, 32
        %s366 = scalar_lea.vmem [#allocation4], %s365
        %s367 = smul.u32 2, %s26
        %p368 = scmp.lt.s32.totalorder %s367, 3
        %s369 = scalar_select %p368, %s367, 3
        %s370 = smul.addr %s369, 8
        %s371 = smul.addr %s370, 4
        %s372 = scalar_lea.vmem %s0, %s371
        %s373 = smul.u32 2, %s26
        %s374 = smul.u32 2, %s26
        %p375 = scmp.lt.s32.totalorder %s374, 3
        %s376 = scalar_select %p375, %s374, 3
        %s377 = smul.addr %s376, 4
        %s378 = smul.addr %s377, 4
        %s379 = scalar_lea.vmem %s1, %s378
        %s380 = smul.u32 2, %s26
        %s381 = smul.u32 2, %s26
        %p382 = scmp.lt.s32.totalorder %s381, 3
        %s383 = scalar_select %p382, %s381, 3
        %s384 = smul.addr %s383, 8
        %s385 = smul.addr %s384, 4
        %s386 = scalar_lea.vmem %s2, %s385
        %s387 = smul.u32 2, %s26
        %s388 = smul.u32 2, %s26
        %p389 = scmp.lt.s32.totalorder %s388, 3
        %s390 = scalar_select %p389, %s388, 3
        %s391 = smul.addr %s390, 8
        %s392 = smul.addr %s391, 4
        %s393 = scalar_lea.vmem %s3, %s392
        %s394 = smul.u32 2, %s26
        %s395 = smul.u32 2, %s26
        %s396 = smul.u32 2, %s26
        %v398 = vld [vmem:[%s372] sm:$0xf]
        %v399 = vld [vmem:[%s372 + $0x4] sm:$0xf]
        %v400 = vld [vmem:[%s372 + $0x8] sm:$0xf]
        %v401 = vld [vmem:[%s372 + $0xc] sm:$0xf]
        %v402 = vld [vmem:[%s372 + $0x10] sm:$0xf]
        %v403 = vld [vmem:[%s372 + $0x14] sm:$0xf]
        %v404 = vld [vmem:[%s372 + $0x18] sm:$0xf]
        %v405 = vld [vmem:[%s372 + $0x1c] sm:$0xf]
        %v406 = vld [vmem:[%s372 + $0x20] sm:$0xf]
        %v407 = vld [vmem:[%s372 + $0x24] sm:$0xf]
        %v408 = vld [vmem:[%s372 + $0x28] sm:$0xf]
        %v409 = vld [vmem:[%s372 + $0x2c] sm:$0xf]
        %v410 = vld [vmem:[%s372 + $0x30] sm:$0xf]
        %v411 = vld [vmem:[%s372 + $0x34] sm:$0xf]
        %v412 = vld [vmem:[%s372 + $0x38] sm:$0xf]
        %v413 = vld [vmem:[%s372 + $0x3c] sm:$0xf]
        %v414 = vld [vmem:[%s379] sm:$0xf]
        %v415 = vld [vmem:[%s379 + $0x4] sm:$0xf]
        %v416 = vld [vmem:[%s379 + $0x8] sm:$0xf]
        %v417 = vld [vmem:[%s379 + $0xc] sm:$0xf]
        %v418 = vld [vmem:[%s379 + $0x10] sm:$0xf]
        %v419 = vld [vmem:[%s379 + $0x14] sm:$0xf]
        %v420 = vld [vmem:[%s379 + $0x18] sm:$0xf]
        %v421 = vld [vmem:[%s379 + $0x1c] sm:$0xf]
        %v422 = vld [vmem:[%s386] sm:$0xf]
        %v423 = vld [vmem:[%s386 + $0x4] sm:$0xf]
        %v424 = vld [vmem:[%s386 + $0x8] sm:$0xf]
        %v425 = vld [vmem:[%s386 + $0xc] sm:$0xf]
        %v426 = vld [vmem:[%s386 + $0x10] sm:$0xf]
        %v427 = vld [vmem:[%s386 + $0x14] sm:$0xf]
        %v428 = vld [vmem:[%s386 + $0x18] sm:$0xf]
        %v429 = vld [vmem:[%s386 + $0x1c] sm:$0xf]
        %v430 = vld [vmem:[%s386 + $0x20] sm:$0xf]
        %v431 = vld [vmem:[%s386 + $0x24] sm:$0xf]
        %v432 = vld [vmem:[%s386 + $0x28] sm:$0xf]
        %v433 = vld [vmem:[%s386 + $0x2c] sm:$0xf]
        %v434 = vld [vmem:[%s386 + $0x30] sm:$0xf]
        %v435 = vld [vmem:[%s386 + $0x34] sm:$0xf]
        %v436 = vld [vmem:[%s386 + $0x38] sm:$0xf]
        %v437 = vld [vmem:[%s386 + $0x3c] sm:$0xf]
        %v438 = vld [vmem:[%s393] sm:$0xf]
        %v439 = vld [vmem:[%s393 + $0x4] sm:$0xf]
        %v440 = vld [vmem:[%s393 + $0x8] sm:$0xf]
        %v441 = vld [vmem:[%s393 + $0xc] sm:$0xf]
        %v442 = vld [vmem:[%s393 + $0x10] sm:$0xf]
        %v443 = vld [vmem:[%s393 + $0x14] sm:$0xf]
        %v444 = vld [vmem:[%s393 + $0x18] sm:$0xf]
        %v445 = vld [vmem:[%s393 + $0x1c] sm:$0xf]
        %v446 = vld [vmem:[%s393 + $0x20] sm:$0xf]
        %v447 = vld [vmem:[%s393 + $0x24] sm:$0xf]
        %v448 = vld [vmem:[%s393 + $0x28] sm:$0xf]
        %v449 = vld [vmem:[%s393 + $0x2c] sm:$0xf]
        %v450 = vld [vmem:[%s393 + $0x30] sm:$0xf]
        %v451 = vld [vmem:[%s393 + $0x34] sm:$0xf]
        %v452 = vld [vmem:[%s393 + $0x38] sm:$0xf]
        %v453 = vld [vmem:[%s393 + $0x3c] sm:$0xf]
        %v454 = vld [vmem:[%s4] sm:$0xf]
        %v455 = vld [vmem:[%s4 + $0x4] sm:$0xf]
        %v456 = vld [vmem:[%s4 + $0x8] sm:$0xf]
        %v457 = vld [vmem:[%s4 + $0xc] sm:$0xf]
        %v458 = vld [vmem:[%s4 + $0x10] sm:$0xf]
        %v459 = vld [vmem:[%s4 + $0x14] sm:$0xf]
        %v460 = vld [vmem:[%s4 + $0x18] sm:$0xf]
        %v461 = vld [vmem:[%s4 + $0x1c] sm:$0xf]
        %v462 = vld [vmem:[%s4 + $0x20] sm:$0xf]
        %v463 = vld [vmem:[%s4 + $0x24] sm:$0xf]
        %v464 = vld [vmem:[%s4 + $0x28] sm:$0xf]
        %v465 = vld [vmem:[%s4 + $0x2c] sm:$0xf]
        %v466 = vld [vmem:[%s4 + $0x30] sm:$0xf]
        %v467 = vld [vmem:[%s4 + $0x34] sm:$0xf]
        %v468 = vld [vmem:[%s4 + $0x38] sm:$0xf]
        %v469 = vld [vmem:[%s4 + $0x3c] sm:$0xf]
        %v470 = vld [vmem:[%s5] sm:$0xf]
        %v471 = vld [vmem:[%s5 + $0x4] sm:$0xf]
        %v472 = vld [vmem:[%s5 + $0x8] sm:$0xf]
        %v473 = vld [vmem:[%s5 + $0xc] sm:$0xf]
        %v474 = vld [vmem:[%s5 + $0x10] sm:$0xf]
        %v475 = vld [vmem:[%s5 + $0x14] sm:$0xf]
        %v476 = vld [vmem:[%s5 + $0x18] sm:$0xf]
        %v477 = vld [vmem:[%s5 + $0x1c] sm:$0xf]
        %v478 = vld [vmem:[%s5 + $0x20] sm:$0xf]
        %v479 = vld [vmem:[%s5 + $0x24] sm:$0xf]
        %v480 = vld [vmem:[%s5 + $0x28] sm:$0xf]
        %v481 = vld [vmem:[%s5 + $0x2c] sm:$0xf]
        %v482 = vld [vmem:[%s5 + $0x30] sm:$0xf]
        %v483 = vld [vmem:[%s5 + $0x34] sm:$0xf]
        %v484 = vld [vmem:[%s5 + $0x38] sm:$0xf]
        %v485 = vld [vmem:[%s5 + $0x3c] sm:$0xf]
        %v486 = vld [vmem:[%s6] sm:$0x1]
        %v495 = vunpack.c.l.b16 %v422
        %v496 = vunpack.c.l.b16 %v423
        %v497 = vunpack.c.l.b16 %v424
        %v498 = vunpack.c.l.b16 %v425
        %v499 = vunpack.c.l.b16 %v426
        %v500 = vunpack.c.l.b16 %v427
        %v501 = vunpack.c.l.b16 %v428
        %v502 = vunpack.c.l.b16 %v429
        %v503 = vpack.c.b16 %v496, %v495
        %v504 = vpack.c.b16 %v498, %v497
        %v505 = vpack.c.b16 %v500, %v499
        %v506 = vpack.c.b16 %v502, %v501
        %511 = vxpose.xlu0.c.b16.start [1/8] %v503, 128
        %512 = vxpose.xlu0.c.b16.cont [2/8] %v504, 128
        %513 = vxpose.xlu0.c.b16.cont [3/8] %v505, 128
        %514 = vxpose.xlu0.c.b16.cont [4/8] %v506, 128
        %515 = vxpose.xlu0.c.b16.cont [5/8] 0, 128
        %516 = vxpose.xlu0.c.b16.cont [6/8] 0, 128
        %517 = vxpose.xlu0.c.b16.cont [7/8] 0, 128
        %518 = vxpose.xlu0.c.b16.end [8/8] 0, 128
        %v519 = vpop.trf.xlu0
        %v520 = vpop.trf.xlu0
        %v521 = vpop.trf.xlu0
        %v522 = vpop.trf.xlu0
        %v523 = vpop.trf.xlu0
        %v524 = vpop.trf.xlu0
        %v525 = vpop.trf.xlu0
        %v526 = vpop.trf.xlu0
        %v535 = vunpack.c.l.b16 %v398
        %v536 = vunpack.c.l.b16 %v399
        %v537 = vunpack.c.l.b16 %v400
        %v538 = vunpack.c.l.b16 %v401
        %v539 = vunpack.c.l.b16 %v402
        %v540 = vunpack.c.l.b16 %v403
        %v541 = vunpack.c.l.b16 %v404
        %v542 = vunpack.c.l.b16 %v405
        %v543 = vpack.c.b16 %v536, %v535
        %v544 = vpack.c.b16 %v538, %v537
        %v545 = vpack.c.b16 %v540, %v539
        %v546 = vpack.c.b16 %v542, %v541
        %vm551 = vcmask 523264
        %v553 = vsel %vm551, %v519, 0
        %v556 = vsel %vm551, %v520, 0
        %558 = vmatprep.subr.bf16.mxu0 0
        %559 = vmatpush1.bf16.msra.mxu0 0
        %560 = vmatprep.subr.bf16.mxu0 0
        %561 = vmatpush1.bf16.msra.mxu0 0
        %562 = vmatprep.subr.bf16.mxu0 0
        %563 = vmatpush1.bf16.msra.mxu0 0
        %564 = vmatprep.subr.bf16.mxu0 0
        %565 = vmatpush1.bf16.msra.mxu0 0
        %566 = vmatprep.subr.bf16.mxu0 0
        %567 = vmatpush1.bf16.msra.mxu0 %v546
        %568 = vmatprep.subr.bf16.mxu0 0
        %569 = vmatpush1.bf16.msra.mxu0 %v545
        %570 = vmatprep.subr.bf16.mxu0 0
        %571 = vmatpush1.bf16.msra.mxu0 %v544
        %572 = vmatprep.subr.bf16.mxu0 0
        %573 = vmatpush1.bf16.msra.mxu0 %v543
        %574 = vmatprep.subr.bf16.mxu0 0
        %575 = vmatpush2.bf16.msra.mxu0 0
        %576 = vmatprep.subr.bf16.mxu0 0
        %577 = vmatpush2.bf16.msra.mxu0 0
        %578 = vmatprep.subr.bf16.mxu0 0
        %579 = vmatpush2.bf16.msra.mxu0 0
        %580 = vmatprep.subr.bf16.mxu0 0
        %581 = vmatpush2.bf16.msra.mxu0 0
        %582 = vmatprep.subr.bf16.mxu0 0
        %583 = vmatpush2.bf16.msra.mxu0 0
        %584 = vmatprep.subr.bf16.mxu0 0
        %585 = vmatpush2.bf16.msra.mxu0 0
        %586 = vmatprep.subr.bf16.mxu0 0
        %587 = vmatpush2.bf16.msra.mxu0 0
        %588 = vmatprep.subr.bf16.mxu0 0
        %589 = vmatpush2.bf16.msra.mxu0 0
        %590 = vmatprep.mubr.bf16.mxu0 0
        %591 = vmatmul.mubr.bf16.gmra.mxu0 %v553
        %v592 = vpop.f32.mrf.mxu0
        %v593 = vadd.f32 0.0, %v592
        %v594 = vpop.f32.mrf.mxu0
        %v595 = vpop.f32.mrf.mxu0
        %v596 = vadd.f32 0.0, %v595
        %v597 = vpop.f32.mrf.mxu0
        %598 = vmatprep.mubr.bf16.mxu0 0
        %599 = vmatmul.mubr.bf16.gmra.mxu0 %v556
        %v600 = vpop.f32.mrf.mxu0
        %v601 = vadd.f32 0.0, %v600
        %v602 = vpop.f32.mrf.mxu0
        %v603 = vpop.f32.mrf.mxu0
        %v604 = vadd.f32 0.0, %v603
        %v605 = vpop.f32.mrf.mxu0
        %606 = vdwg.mxu0
        %v615 = vunpack.c.l.b16 %v430
        %v616 = vunpack.c.l.b16 %v431
        %v617 = vunpack.c.l.b16 %v432
        %v618 = vunpack.c.l.b16 %v433
        %v619 = vunpack.c.l.b16 %v434
        %v620 = vunpack.c.l.b16 %v435
        %v621 = vunpack.c.l.b16 %v436
        %v622 = vunpack.c.l.b16 %v437
        %v623 = vpack.c.b16 %v616, %v615
        %v624 = vpack.c.b16 %v618, %v617
        %v625 = vpack.c.b16 %v620, %v619
        %v626 = vpack.c.b16 %v622, %v621
        %631 = vxpose.xlu0.c.b16.start [1/8] %v623, 128
        %632 = vxpose.xlu0.c.b16.cont [2/8] %v624, 128
        %633 = vxpose.xlu0.c.b16.cont [3/8] %v625, 128
        %634 = vxpose.xlu0.c.b16.cont [4/8] %v626, 128
        %635 = vxpose.xlu0.c.b16.cont [5/8] 0, 128
        %636 = vxpose.xlu0.c.b16.cont [6/8] 0, 128
        %637 = vxpose.xlu0.c.b16.cont [7/8] 0, 128
        %638 = vxpose.xlu0.c.b16.end [8/8] 0, 128
        %v639 = vpop.trf.xlu0
        %v640 = vpop.trf.xlu0
        %v641 = vpop.trf.xlu0
        %v642 = vpop.trf.xlu0
        %v643 = vpop.trf.xlu0
        %v644 = vpop.trf.xlu0
        %v645 = vpop.trf.xlu0
        %v646 = vpop.trf.xlu0
        %v655 = vunpack.c.l.b16 %v406
        %v656 = vunpack.c.l.b16 %v407
        %v657 = vunpack.c.l.b16 %v408
        %v658 = vunpack.c.l.b16 %v409
        %v659 = vunpack.c.l.b16 %v410
        %v660 = vunpack.c.l.b16 %v411
        %v661 = vunpack.c.l.b16 %v412
        %v662 = vunpack.c.l.b16 %v413
        %v663 = vpack.c.b16 %v656, %v655
        %v664 = vpack.c.b16 %v658, %v657
        %v665 = vpack.c.b16 %v660, %v659
        %v666 = vpack.c.b16 %v662, %v661
        %v672 = vsel %vm551, %v639, 0
        %v675 = vsel %vm551, %v640, 0
        %677 = vmatprep.subr.bf16.mxu0 0
        %678 = vmatpush1.bf16.msra.mxu0 0
        %679 = vmatprep.subr.bf16.mxu0 0
        %680 = vmatpush1.bf16.msra.mxu0 0
        %681 = vmatprep.subr.bf16.mxu0 0
        %682 = vmatpush1.bf16.msra.mxu0 0
        %683 = vmatprep.subr.bf16.mxu0 0
        %684 = vmatpush1.bf16.msra.mxu0 0
        %685 = vmatprep.subr.bf16.mxu0 0
        %686 = vmatpush1.bf16.msra.mxu0 %v666
        %687 = vmatprep.subr.bf16.mxu0 0
        %688 = vmatpush1.bf16.msra.mxu0 %v665
        %689 = vmatprep.subr.bf16.mxu0 0
        %690 = vmatpush1.bf16.msra.mxu0 %v664
        %691 = vmatprep.subr.bf16.mxu0 0
        %692 = vmatpush1.bf16.msra.mxu0 %v663
        %693 = vmatprep.subr.bf16.mxu0 0
        %694 = vmatpush2.bf16.msra.mxu0 0
        %695 = vmatprep.subr.bf16.mxu0 0
        %696 = vmatpush2.bf16.msra.mxu0 0
        %697 = vmatprep.subr.bf16.mxu0 0
        %698 = vmatpush2.bf16.msra.mxu0 0
        %699 = vmatprep.subr.bf16.mxu0 0
        %700 = vmatpush2.bf16.msra.mxu0 0
        %701 = vmatprep.subr.bf16.mxu0 0
        %702 = vmatpush2.bf16.msra.mxu0 0
        %703 = vmatprep.subr.bf16.mxu0 0
        %704 = vmatpush2.bf16.msra.mxu0 0
        %705 = vmatprep.subr.bf16.mxu0 0
        %706 = vmatpush2.bf16.msra.mxu0 0
        %707 = vmatprep.subr.bf16.mxu0 0
        %708 = vmatpush2.bf16.msra.mxu0 0
        %709 = vmatprep.mubr.bf16.mxu0 0
        %710 = vmatmul.mubr.bf16.gmra.mxu0 %v672
        %v711 = vpop.f32.mrf.mxu0
        %v712 = vadd.f32 0.0, %v711
        %v713 = vpop.f32.mrf.mxu0
        %v714 = vpop.f32.mrf.mxu0
        %v715 = vadd.f32 0.0, %v714
        %v716 = vpop.f32.mrf.mxu0
        %717 = vmatprep.mubr.bf16.mxu0 0
        %718 = vmatmul.mubr.bf16.gmra.mxu0 %v675
        %v719 = vpop.f32.mrf.mxu0
        %v720 = vadd.f32 0.0, %v719
        %v721 = vpop.f32.mrf.mxu0
        %v722 = vpop.f32.mrf.mxu0
        %v723 = vadd.f32 0.0, %v722
        %v724 = vpop.f32.mrf.mxu0
        %725 = vdwg.mxu0
        %v726 = vpack.c.bf16 %v596, %v593
        %v727 = vpack.c.bf16 %v604, %v601
        %v728 = vpack.c.bf16 %v715, %v712
        %v729 = vpack.c.bf16 %v723, %v720
        %v746 = vunpack.c.l.b16 %v470
        %v747 = vunpack.c.l.b16 %v471
        %v748 = vunpack.c.l.b16 %v472
        %v749 = vunpack.c.l.b16 %v473
        %v750 = vunpack.c.l.b16 %v474
        %v751 = vunpack.c.l.b16 %v475
        %v752 = vunpack.c.l.b16 %v476
        %v753 = vunpack.c.l.b16 %v477
        %v754 = vunpack.c.l.b16 %v478
        %v755 = vunpack.c.l.b16 %v479
        %v756 = vunpack.c.l.b16 %v480
        %v757 = vunpack.c.l.b16 %v481
        %v758 = vunpack.c.l.b16 %v482
        %v759 = vunpack.c.l.b16 %v483
        %v760 = vunpack.c.l.b16 %v484
        %v761 = vunpack.c.l.b16 %v485
        %v762 = vpack.c.b16 %v747, %v746
        %v763 = vpack.c.b16 %v749, %v748
        %v764 = vpack.c.b16 %v751, %v750
        %v765 = vpack.c.b16 %v753, %v752
        %v766 = vpack.c.b16 %v755, %v754
        %v767 = vpack.c.b16 %v757, %v756
        %v768 = vpack.c.b16 %v759, %v758
        %v769 = vpack.c.b16 %v761, %v760
        %778 = vmatprep.subr.bf16.mxu0 0
        %779 = vmatpush1.bf16.msra.mxu0 %v769
        %780 = vmatprep.subr.bf16.mxu0 0
        %781 = vmatpush1.bf16.msra.mxu0 %v768
        %782 = vmatprep.subr.bf16.mxu0 0
        %783 = vmatpush1.bf16.msra.mxu0 %v767
        %784 = vmatprep.subr.bf16.mxu0 0
        %785 = vmatpush1.bf16.msra.mxu0 %v766
        %786 = vmatprep.subr.bf16.mxu0 0
        %787 = vmatpush1.bf16.msra.mxu0 %v765
        %788 = vmatprep.subr.bf16.mxu0 0
        %789 = vmatpush1.bf16.msra.mxu0 %v764
        %790 = vmatprep.subr.bf16.mxu0 0
        %791 = vmatpush1.bf16.msra.mxu0 %v763
        %792 = vmatprep.subr.bf16.mxu0 0
        %793 = vmatpush1.bf16.msra.mxu0 %v762
        %794 = vmatprep.subr.bf16.mxu0 0
        %795 = vmatpush2.bf16.msra.mxu0 0
        %796 = vmatprep.subr.bf16.mxu0 0
        %797 = vmatpush2.bf16.msra.mxu0 0
        %798 = vmatprep.subr.bf16.mxu0 0
        %799 = vmatpush2.bf16.msra.mxu0 0
        %800 = vmatprep.subr.bf16.mxu0 0
        %801 = vmatpush2.bf16.msra.mxu0 0
        %802 = vmatprep.subr.bf16.mxu0 0
        %803 = vmatpush2.bf16.msra.mxu0 0
        %804 = vmatprep.subr.bf16.mxu0 0
        %805 = vmatpush2.bf16.msra.mxu0 0
        %806 = vmatprep.subr.bf16.mxu0 0
        %807 = vmatpush2.bf16.msra.mxu0 0
        %808 = vmatprep.subr.bf16.mxu0 0
        %809 = vmatpush2.bf16.msra.mxu0 0
        %810 = vmatprep.mubr.bf16.mxu0 0
        %811 = vmatmul.mubr.bf16.gmra.mxu0 %v726
        %v812 = vpop.f32.mrf.mxu0
        %v813 = vadd.f32 0.0, %v812
        %v814 = vpop.f32.mrf.mxu0
        %v815 = vpop.f32.mrf.mxu0
        %v816 = vadd.f32 0.0, %v815
        %v817 = vpop.f32.mrf.mxu0
        %818 = vmatprep.mubr.bf16.mxu0 0
        %819 = vmatmul.mubr.bf16.gmra.mxu0 %v727
        %v820 = vpop.f32.mrf.mxu0
        %v821 = vadd.f32 0.0, %v820
        %v822 = vpop.f32.mrf.mxu0
        %v823 = vpop.f32.mrf.mxu0
        %v824 = vadd.f32 0.0, %v823
        %v825 = vpop.f32.mrf.mxu0
        %826 = vmatprep.mubr.bf16.mxu0 0
        %827 = vmatmul.mubr.bf16.gmra.mxu0 %v728
        %v828 = vpop.f32.mrf.mxu0
        %v829 = vadd.f32 0.0, %v828
        %v830 = vpop.f32.mrf.mxu0
        %v831 = vpop.f32.mrf.mxu0
        %v832 = vadd.f32 0.0, %v831
        %v833 = vpop.f32.mrf.mxu0
        %834 = vmatprep.mubr.bf16.mxu0 0
        %835 = vmatmul.mubr.bf16.gmra.mxu0 %v729
        %v836 = vpop.f32.mrf.mxu0
        %v837 = vadd.f32 0.0, %v836
        %v838 = vpop.f32.mrf.mxu0
        %v839 = vpop.f32.mrf.mxu0
        %v840 = vadd.f32 0.0, %v839
        %v841 = vpop.f32.mrf.mxu0
        %842 = vdwg.mxu0
        %v851 = vunpack.c.l.b16 %v414
        %v852 = vunpack.c.l.b16 %v415
        %v853 = vunpack.c.l.b16 %v416
        %v854 = vunpack.c.l.b16 %v417
        %v855 = vunpack.c.l.b16 %v418
        %v856 = vunpack.c.l.b16 %v419
        %v857 = vunpack.c.l.b16 %v420
        %v858 = vunpack.c.l.b16 %v421
        %v859 = vpack.c.b16 %v852, %v851
        %v860 = vpack.c.b16 %v854, %v853
        %v861 = vpack.c.b16 %v856, %v855
        %v862 = vpack.c.b16 %v858, %v857
        %v883 = vunpack.c.l.b16 %v454
        %v884 = vunpack.c.l.b16 %v455
        %v885 = vunpack.c.l.b16 %v456
        %v886 = vunpack.c.l.b16 %v457
        %v887 = vunpack.c.l.b16 %v458
        %v888 = vunpack.c.l.b16 %v459
        %v889 = vunpack.c.l.b16 %v460
        %v890 = vunpack.c.l.b16 %v461
        %v891 = vunpack.c.l.b16 %v462
        %v892 = vunpack.c.l.b16 %v463
        %v893 = vunpack.c.l.b16 %v464
        %v894 = vunpack.c.l.b16 %v465
        %v895 = vunpack.c.l.b16 %v466
        %v896 = vunpack.c.l.b16 %v467
        %v897 = vunpack.c.l.b16 %v468
        %v898 = vunpack.c.l.b16 %v469
        %v899 = vpack.c.b16 %v884, %v883
        %v900 = vpack.c.b16 %v886, %v885
        %v901 = vpack.c.b16 %v888, %v887
        %v902 = vpack.c.b16 %v890, %v889
        %v903 = vpack.c.b16 %v892, %v891
        %v904 = vpack.c.b16 %v894, %v893
        %v905 = vpack.c.b16 %v896, %v895
        %v906 = vpack.c.b16 %v898, %v897
        %915 = vmatprep.subr.bf16.mxu0 0
        %916 = vmatpush1.bf16.msra.mxu0 %v906
        %917 = vmatprep.subr.bf16.mxu0 0
        %918 = vmatpush1.bf16.msra.mxu0 %v905
        %919 = vmatprep.subr.bf16.mxu0 0
        %920 = vmatpush1.bf16.msra.mxu0 %v904
        %921 = vmatprep.subr.bf16.mxu0 0
        %922 = vmatpush1.bf16.msra.mxu0 %v903
        %923 = vmatprep.subr.bf16.mxu0 0
        %924 = vmatpush1.bf16.msra.mxu0 %v902
        %925 = vmatprep.subr.bf16.mxu0 0
        %926 = vmatpush1.bf16.msra.mxu0 %v901
        %927 = vmatprep.subr.bf16.mxu0 0
        %928 = vmatpush1.bf16.msra.mxu0 %v900
        %929 = vmatprep.subr.bf16.mxu0 0
        %930 = vmatpush1.bf16.msra.mxu0 %v899
        %931 = vmatprep.subr.bf16.mxu0 0
        %932 = vmatpush2.bf16.msra.mxu0 0
        %933 = vmatprep.subr.bf16.mxu0 0
        %934 = vmatpush2.bf16.msra.mxu0 0
        %935 = vmatprep.subr.bf16.mxu0 0
        %936 = vmatpush2.bf16.msra.mxu0 0
        %937 = vmatprep.subr.bf16.mxu0 0
        %938 = vmatpush2.bf16.msra.mxu0 0
        %939 = vmatprep.subr.bf16.mxu0 0
        %940 = vmatpush2.bf16.msra.mxu0 0
        %941 = vmatprep.subr.bf16.mxu0 0
        %942 = vmatpush2.bf16.msra.mxu0 0
        %943 = vmatprep.subr.bf16.mxu0 0
        %944 = vmatpush2.bf16.msra.mxu0 0
        %945 = vmatprep.subr.bf16.mxu0 0
        %946 = vmatpush2.bf16.msra.mxu0 0
        %947 = vmatprep.mubr.bf16.mxu0 0
        %948 = vmatmul.mubr.bf16.gmra.mxu0 %v859
        %v949 = vpop.f32.mrf.mxu0
        %v950 = vadd.f32 %v813, %v949
        %v951 = vpop.f32.mrf.mxu0
        %v952 = vpop.f32.mrf.mxu0
        %v953 = vadd.f32 %v816, %v952
        %v954 = vpop.f32.mrf.mxu0
        %955 = vmatprep.mubr.bf16.mxu0 0
        %956 = vmatmul.mubr.bf16.gmra.mxu0 %v860
        %v957 = vpop.f32.mrf.mxu0
        %v958 = vadd.f32 %v821, %v957
        %v959 = vpop.f32.mrf.mxu0
        %v960 = vpop.f32.mrf.mxu0
        %v961 = vadd.f32 %v824, %v960
        %v962 = vpop.f32.mrf.mxu0
        %963 = vmatprep.mubr.bf16.mxu0 0
        %964 = vmatmul.mubr.bf16.gmra.mxu0 %v861
        %v965 = vpop.f32.mrf.mxu0
        %v966 = vadd.f32 %v829, %v965
        %v967 = vpop.f32.mrf.mxu0
        %v968 = vpop.f32.mrf.mxu0
        %v969 = vadd.f32 %v832, %v968
        %v970 = vpop.f32.mrf.mxu0
        %971 = vmatprep.mubr.bf16.mxu0 0
        %972 = vmatmul.mubr.bf16.gmra.mxu0 %v862
        %v973 = vpop.f32.mrf.mxu0
        %v974 = vadd.f32 %v837, %v973
        %v975 = vpop.f32.mrf.mxu0
        %v976 = vpop.f32.mrf.mxu0
        %v977 = vadd.f32 %v840, %v976
        %v978 = vpop.f32.mrf.mxu0
        %979 = vdwg.mxu0
        %v981 = vlaneseq
        %v982 = vshrl.u32 %v981, 7
        %v983 = vsub.s32 0, %v982
        %v984 = vrot.slane %v486, %v983
        %v986 = vadd.f32 %v950, %v984
        %v987 = vadd.f32 %v953, %v984
        %v988 = vadd.f32 %v958, %v984
        %v989 = vadd.f32 %v961, %v984
        %v990 = vadd.f32 %v966, %v984
        %v991 = vadd.f32 %v969, %v984
        %v992 = vadd.f32 %v974, %v984
        %v993 = vadd.f32 %v977, %v984
        %vm994 = vcmp.ge.f32.partialorder %v986, 0.0
        %vm995 = vcmp.ge.f32.partialorder %v987, 0.0
        %vm996 = vcmp.ge.f32.partialorder %v988, 0.0
        %vm997 = vcmp.ge.f32.partialorder %v989, 0.0
        %vm998 = vcmp.ge.f32.partialorder %v990, 0.0
        %vm999 = vcmp.ge.f32.partialorder %v991, 0.0
        %vm1000 = vcmp.ge.f32.partialorder %v992, 0.0
        %vm1001 = vcmp.ge.f32.partialorder %v993, 0.0
        %v1002 = vmul.f32 %v986, 0.2
        %v1003 = vmul.f32 %v987, 0.2
        %v1004 = vmul.f32 %v988, 0.2
        %v1005 = vmul.f32 %v989, 0.2
        %v1006 = vmul.f32 %v990, 0.2
        %v1007 = vmul.f32 %v991, 0.2
        %v1008 = vmul.f32 %v992, 0.2
        %v1009 = vmul.f32 %v993, 0.2
        %v1010 = vsel %vm994, %v986, %v1002
        %v1011 = vsel %vm995, %v987, %v1003
        %v1012 = vsel %vm996, %v988, %v1004
        %v1013 = vsel %vm997, %v989, %v1005
        %v1014 = vsel %vm998, %v990, %v1006
        %v1015 = vsel %vm999, %v991, %v1007
        %v1016 = vsel %vm1000, %v992, %v1008
        %v1017 = vsel %vm1001, %v993, %v1009
        %v1018 = vpack.c.bf16 %v1011, %v1010
        %v1019 = vpack.c.bf16 %v1013, %v1012
        %v1020 = vpack.c.bf16 %v1015, %v1014
        %v1021 = vpack.c.bf16 %v1017, %v1016
        %v1030 = vunpack.c.l.b16 %v438
        %v1031 = vunpack.c.l.b16 %v439
        %v1032 = vunpack.c.l.b16 %v440
        %v1033 = vunpack.c.l.b16 %v441
        %v1034 = vunpack.c.l.b16 %v442
        %v1035 = vunpack.c.l.b16 %v443
        %v1036 = vunpack.c.l.b16 %v444
        %v1037 = vunpack.c.l.b16 %v445
        %v1038 = vpack.c.b16 %v1031, %v1030
        %v1039 = vpack.c.b16 %v1033, %v1032
        %v1040 = vpack.c.b16 %v1035, %v1034
        %v1041 = vpack.c.b16 %v1037, %v1036
        %vm1042 = vcmask 261120
        %v1044 = vsel %vm1042, %v1038, 0
        %v1047 = vsel %vm1042, %v1039, 0
        %v1050 = vsel %vm1042, %v1040, 0
        %v1053 = vsel %vm1042, %v1041, 0
        %1055 = vmatprep.subr.bf16.mxu0 0
        %1056 = vmatpush1.bf16.msra.mxu0 0
        %1057 = vmatprep.subr.bf16.mxu0 0
        %1058 = vmatpush1.bf16.msra.mxu0 0
        %1059 = vmatprep.subr.bf16.mxu0 0
        %1060 = vmatpush1.bf16.msra.mxu0 0
        %1061 = vmatprep.subr.bf16.mxu0 0
        %1062 = vmatpush1.bf16.msra.mxu0 0
        %1063 = vmatprep.subr.bf16.mxu0 0
        %1064 = vmatpush1.bf16.msra.mxu0 0
        %1065 = vmatprep.subr.bf16.mxu0 0
        %1066 = vmatpush1.bf16.msra.mxu0 0
        %1067 = vmatprep.subr.bf16.mxu0 0
        %1068 = vmatpush1.bf16.msra.mxu0 %v1019
        %1069 = vmatprep.subr.bf16.mxu0 0
        %1070 = vmatpush1.bf16.msra.mxu0 %v1018
        %1071 = vmatprep.subr.bf16.mxu0 0
        %1072 = vmatpush2.bf16.msra.mxu0 0
        %1073 = vmatprep.subr.bf16.mxu0 0
        %1074 = vmatpush2.bf16.msra.mxu0 0
        %1075 = vmatprep.subr.bf16.mxu0 0
        %1076 = vmatpush2.bf16.msra.mxu0 0
        %1077 = vmatprep.subr.bf16.mxu0 0
        %1078 = vmatpush2.bf16.msra.mxu0 0
        %1079 = vmatprep.subr.bf16.mxu0 0
        %1080 = vmatpush2.bf16.msra.mxu0 0
        %1081 = vmatprep.subr.bf16.mxu0 0
        %1082 = vmatpush2.bf16.msra.mxu0 0
        %1083 = vmatprep.subr.bf16.mxu0 0
        %1084 = vmatpush2.bf16.msra.mxu0 0
        %1085 = vmatprep.subr.bf16.mxu0 0
        %1086 = vmatpush2.bf16.msra.mxu0 0
        %1087 = vmatprep.mubr.bf16.mxu0 0
        %1088 = vmatmul.mubr.bf16.gmra.mxu0 %v1044
        %v1089 = vpop.f32.mrf.mxu0
        %v1090 = vadd.f32 0.0, %v1089
        %v1091 = vpop.f32.mrf.mxu0
        %v1092 = vpop.f32.mrf.mxu0
        %v1093 = vadd.f32 0.0, %v1092
        %v1094 = vpop.f32.mrf.mxu0
        %1095 = vmatprep.mubr.bf16.mxu0 0
        %1096 = vmatmul.mubr.bf16.gmra.mxu0 %v1047
        %v1097 = vpop.f32.mrf.mxu0
        %v1098 = vadd.f32 0.0, %v1097
        %v1099 = vpop.f32.mrf.mxu0
        %v1100 = vpop.f32.mrf.mxu0
        %v1101 = vadd.f32 0.0, %v1100
        %v1102 = vpop.f32.mrf.mxu0
        %1103 = vmatprep.mubr.bf16.mxu0 0
        %1104 = vmatmul.mubr.bf16.gmra.mxu0 %v1050
        %v1105 = vpop.f32.mrf.mxu0
        %v1106 = vadd.f32 0.0, %v1105
        %v1107 = vpop.f32.mrf.mxu0
        %v1108 = vpop.f32.mrf.mxu0
        %v1109 = vadd.f32 0.0, %v1108
        %v1110 = vpop.f32.mrf.mxu0
        %1111 = vmatprep.mubr.bf16.mxu0 0
        %1112 = vmatmul.mubr.bf16.gmra.mxu0 %v1053
        %v1113 = vpop.f32.mrf.mxu0
        %v1114 = vadd.f32 0.0, %v1113
        %v1115 = vpop.f32.mrf.mxu0
        %v1116 = vpop.f32.mrf.mxu0
        %v1117 = vadd.f32 0.0, %v1116
        %v1118 = vpop.f32.mrf.mxu0
        %1119 = vdwg.mxu0
        %v1128 = vunpack.c.l.b16 %v446
        %v1129 = vunpack.c.l.b16 %v447
        %v1130 = vunpack.c.l.b16 %v448
        %v1131 = vunpack.c.l.b16 %v449
        %v1132 = vunpack.c.l.b16 %v450
        %v1133 = vunpack.c.l.b16 %v451
        %v1134 = vunpack.c.l.b16 %v452
        %v1135 = vunpack.c.l.b16 %v453
        %v1136 = vpack.c.b16 %v1129, %v1128
        %v1137 = vpack.c.b16 %v1131, %v1130
        %v1138 = vpack.c.b16 %v1133, %v1132
        %v1139 = vpack.c.b16 %v1135, %v1134
        %v1141 = vsel %vm1042, %v1136, 0
        %v1144 = vsel %vm1042, %v1137, 0
        %v1147 = vsel %vm1042, %v1138, 0
        %v1150 = vsel %vm1042, %v1139, 0
        %1152 = vmatprep.subr.bf16.mxu0 0
        %1153 = vmatpush1.bf16.msra.mxu0 0
        %1154 = vmatprep.subr.bf16.mxu0 0
        %1155 = vmatpush1.bf16.msra.mxu0 0
        %1156 = vmatprep.subr.bf16.mxu0 0
        %1157 = vmatpush1.bf16.msra.mxu0 0
        %1158 = vmatprep.subr.bf16.mxu0 0
        %1159 = vmatpush1.bf16.msra.mxu0 0
        %1160 = vmatprep.subr.bf16.mxu0 0
        %1161 = vmatpush1.bf16.msra.mxu0 0
        %1162 = vmatprep.subr.bf16.mxu0 0
        %1163 = vmatpush1.bf16.msra.mxu0 0
        %1164 = vmatprep.subr.bf16.mxu0 0
        %1165 = vmatpush1.bf16.msra.mxu0 %v1021
        %1166 = vmatprep.subr.bf16.mxu0 0
        %1167 = vmatpush1.bf16.msra.mxu0 %v1020
        %1168 = vmatprep.subr.bf16.mxu0 0
        %1169 = vmatpush2.bf16.msra.mxu0 0
        %1170 = vmatprep.subr.bf16.mxu0 0
        %1171 = vmatpush2.bf16.msra.mxu0 0
        %1172 = vmatprep.subr.bf16.mxu0 0
        %1173 = vmatpush2.bf16.msra.mxu0 0
        %1174 = vmatprep.subr.bf16.mxu0 0
        %1175 = vmatpush2.bf16.msra.mxu0 0
        %1176 = vmatprep.subr.bf16.mxu0 0
        %1177 = vmatpush2.bf16.msra.mxu0 0
        %1178 = vmatprep.subr.bf16.mxu0 0
        %1179 = vmatpush2.bf16.msra.mxu0 0
        %1180 = vmatprep.subr.bf16.mxu0 0
        %1181 = vmatpush2.bf16.msra.mxu0 0
        %1182 = vmatprep.subr.bf16.mxu0 0
        %1183 = vmatpush2.bf16.msra.mxu0 0
        %1184 = vmatprep.mubr.bf16.mxu0 0
        %1185 = vmatmul.mubr.bf16.gmra.mxu0 %v1141
        %v1186 = vpop.f32.mrf.mxu0
        %v1187 = vadd.f32 0.0, %v1186
        %v1188 = vpop.f32.mrf.mxu0
        %v1189 = vpop.f32.mrf.mxu0
        %v1190 = vadd.f32 0.0, %v1189
        %v1191 = vpop.f32.mrf.mxu0
        %1192 = vmatprep.mubr.bf16.mxu0 0
        %1193 = vmatmul.mubr.bf16.gmra.mxu0 %v1144
        %v1194 = vpop.f32.mrf.mxu0
        %v1195 = vadd.f32 0.0, %v1194
        %v1196 = vpop.f32.mrf.mxu0
        %v1197 = vpop.f32.mrf.mxu0
        %v1198 = vadd.f32 0.0, %v1197
        %v1199 = vpop.f32.mrf.mxu0
        %1200 = vmatprep.mubr.bf16.mxu0 0
        %1201 = vmatmul.mubr.bf16.gmra.mxu0 %v1147
        %v1202 = vpop.f32.mrf.mxu0
        %v1203 = vadd.f32 0.0, %v1202
        %v1204 = vpop.f32.mrf.mxu0
        %v1205 = vpop.f32.mrf.mxu0
        %v1206 = vadd.f32 0.0, %v1205
        %v1207 = vpop.f32.mrf.mxu0
        %1208 = vmatprep.mubr.bf16.mxu0 0
        %1209 = vmatmul.mubr.bf16.gmra.mxu0 %v1150
        %v1210 = vpop.f32.mrf.mxu0
        %v1211 = vadd.f32 0.0, %v1210
        %v1212 = vpop.f32.mrf.mxu0
        %v1213 = vpop.f32.mrf.mxu0
        %v1214 = vadd.f32 0.0, %v1213
        %v1215 = vpop.f32.mrf.mxu0
        %1216 = vdwg.mxu0
        %v1221 = vunpack.c.l.b16 %v1018
        %v1222 = vunpack.c.h.b16 %v1018
        %v1223 = vunpack.c.l.b16 %v1019
        %v1224 = vunpack.c.h.b16 %v1019
        %v1225 = vunpack.c.l.b16 %v1020
        %v1226 = vunpack.c.h.b16 %v1020
        %v1227 = vunpack.c.l.b16 %v1021
        %v1228 = vunpack.c.h.b16 %v1021
        %v1229 = vpack.c.b16 %v1221, %v1221
        %v1230 = vpack.c.b16 %v1222, %v1222
        %v1231 = vpack.c.b16 %v1223, %v1223
        %v1232 = vpack.c.b16 %v1224, %v1224
        %v1233 = vpack.c.b16 %v1225, %v1225
        %v1234 = vpack.c.b16 %v1226, %v1226
        %v1235 = vpack.c.b16 %v1227, %v1227
        %v1236 = vpack.c.b16 %v1228, %v1228
        %1245 = vst [vmem:[%s366] sm:$0xf] %v1229
        %1246 = vst [vmem:[%s366 + $0x4] sm:$0xf] %v1230
        %1247 = vst [vmem:[%s366 + $0x8] sm:$0xf] %v1231
        %1248 = vst [vmem:[%s366 + $0xc] sm:$0xf] %v1232
        %1249 = vst [vmem:[%s366 + $0x10] sm:$0xf] %v1233
        %1250 = vst [vmem:[%s366 + $0x14] sm:$0xf] %v1234
        %1251 = vst [vmem:[%s366 + $0x18] sm:$0xf] %v1235
        %1252 = vst [vmem:[%s366 + $0x1c] sm:$0xf] %v1236
        %v1253 = vpack.c.bf16 %v1093, %v1090
        %v1254 = vpack.c.bf16 %v1101, %v1098
        %v1255 = vpack.c.bf16 %v1109, %v1106
        %v1256 = vpack.c.bf16 %v1117, %v1114
        %v1257 = vpack.c.bf16 %v1190, %v1187
        %v1258 = vpack.c.bf16 %v1198, %v1195
        %v1259 = vpack.c.bf16 %v1206, %v1203
        %v1260 = vpack.c.bf16 %v1214, %v1211
        %v1269 = vunpack.c.l.b16 %v1253
        %v1270 = vunpack.c.h.b16 %v1253
        %v1271 = vunpack.c.l.b16 %v1254
        %v1272 = vunpack.c.h.b16 %v1254
        %v1273 = vunpack.c.l.b16 %v1255
        %v1274 = vunpack.c.h.b16 %v1255
        %v1275 = vunpack.c.l.b16 %v1256
        %v1276 = vunpack.c.h.b16 %v1256
        %v1277 = vunpack.c.l.b16 %v1257
        %v1278 = vunpack.c.h.b16 %v1257
        %v1279 = vunpack.c.l.b16 %v1258
        %v1280 = vunpack.c.h.b16 %v1258
        %v1281 = vunpack.c.l.b16 %v1259
        %v1282 = vunpack.c.h.b16 %v1259
        %v1283 = vunpack.c.l.b16 %v1260
        %v1284 = vunpack.c.h.b16 %v1260
        %v1285 = vpack.c.b16 %v1269, %v1269
        %v1286 = vpack.c.b16 %v1270, %v1270
        %v1287 = vpack.c.b16 %v1271, %v1271
        %v1288 = vpack.c.b16 %v1272, %v1272
        %v1289 = vpack.c.b16 %v1273, %v1273
        %v1290 = vpack.c.b16 %v1274, %v1274
        %v1291 = vpack.c.b16 %v1275, %v1275
        %v1292 = vpack.c.b16 %v1276, %v1276
        %v1293 = vpack.c.b16 %v1277, %v1277
        %v1294 = vpack.c.b16 %v1278, %v1278
        %v1295 = vpack.c.b16 %v1279, %v1279
        %v1296 = vpack.c.b16 %v1280, %v1280
        %v1297 = vpack.c.b16 %v1281, %v1281
        %v1298 = vpack.c.b16 %v1282, %v1282
        %v1299 = vpack.c.b16 %v1283, %v1283
        %v1300 = vpack.c.b16 %v1284, %v1284
        %1317 = vst [vmem:[%s359] sm:$0xf] %v1285
        %1318 = vst [vmem:[%s359 + $0x4] sm:$0xf] %v1286
        %1319 = vst [vmem:[%s359 + $0x8] sm:$0xf] %v1287
        %1320 = vst [vmem:[%s359 + $0xc] sm:$0xf] %v1288
        %1321 = vst [vmem:[%s359 + $0x10] sm:$0xf] %v1289
        %1322 = vst [vmem:[%s359 + $0x14] sm:$0xf] %v1290
        %1323 = vst [vmem:[%s359 + $0x18] sm:$0xf] %v1291
        %1324 = vst [vmem:[%s359 + $0x1c] sm:$0xf] %v1292
        %1325 = vst [vmem:[%s359 + $0x20] sm:$0xf] %v1293
        %1326 = vst [vmem:[%s359 + $0x24] sm:$0xf] %v1294
        %1327 = vst [vmem:[%s359 + $0x28] sm:$0xf] %v1295
        %1328 = vst [vmem:[%s359 + $0x2c] sm:$0xf] %v1296
        %1329 = vst [vmem:[%s359 + $0x30] sm:$0xf] %v1297
        %1330 = vst [vmem:[%s359 + $0x34] sm:$0xf] %v1298
        %1331 = vst [vmem:[%s359 + $0x38] sm:$0xf] %v1299
        %1332 = vst [vmem:[%s359 + $0x3c] sm:$0xf] %v1300
        %s1333 = sand.u32 %s201, 1
        %s1334 = scalar_lea.sflag [#allocation3], %s1333
        %s1335 = sand.u32 %s201, 1
        %s1336 = smul.addr %s1335, 64
        %s1337 = scalar_lea.vmem [#allocation2], %s1336
        %s1338 = sand.u32 %s227, 1
        %s1339 = scalar_lea.sflag [#allocation5], %s1338
        %s1340 = sand.u32 %s227, 1
        %s1341 = smul.addr %s1340, 32
        %s1342 = scalar_lea.vmem [#allocation4], %s1341
        // Predicated region
        $region49: #{tpu_custom_call.1} parent=47 // pred_check
          %p1343 = pneg %p211
        $region50: #{tpu_custom_call.1} parent=47 // pred_check_branch
          %1345 = sbr.rel (%p1343) target = $region52
        $region51: #{tpu_custom_call.1} parent=47 // pred_region
          %s1346 = smul.u32 2, %s26
          %s1348 = ssub.s32 1024, 1024
          %1349 = vsyncadd %s1334, %s1348
          %s1350 = smul.addr %s1346, 8
          %s1351 = smul.addr %s1350, 64
          %s1352 = scalar_lea.hbm %s7, %s1351
          %s1353 = sshll.u32 %s1337, 4
          %s1354 = int_to_ptr.vmem [resolvable:$true] %s1353
          %1359 = dma.vmem_to_hbm [thread:$0]  %s1354, 1024, %s1352, %s1334, 64, 64, 4
        $region52: #{tpu_custom_call.1} parent=47 // pred_fallthru
          _
        // Predicated region
        $region53: #{tpu_custom_call.1} parent=47 // pred_check
          %p1360 = pneg %p237
        $region54: #{tpu_custom_call.1} parent=47 // pred_check_branch
          %1362 = sbr.rel (%p1360) target = $region56
        $region55: #{tpu_custom_call.1} parent=47 // pred_region
          %s1363 = smul.u32 2, %s26
          %s1365 = ssub.s32 512, 512
          %1366 = vsyncadd %s1339, %s1365
          %s1367 = smul.addr %s1363, 4
          %s1368 = smul.addr %s1367, 64
          %s1369 = scalar_lea.hbm %s8, %s1368
          %s1370 = sshll.u32 %s1342, 4
          %s1371 = int_to_ptr.vmem [resolvable:$true] %s1370
          %1376 = dma.vmem_to_hbm [thread:$0]  %s1371, 512, %s1369, %s1339, 64, 64, 4
        $region56: #{tpu_custom_call.1} parent=47 // pred_fallthru
          _
      $region48: #{tpu_custom_call.1} parent=5 // pred_fallthru
        _
      %p1377 = scmp.le.s32.totalorder 2, %s21
      // Predicated region
      $region57: #{tpu_custom_call.1} parent=5 // pred_check
        %p1378 = pneg %p1377
      $region58: #{tpu_custom_call.1} parent=5 // pred_check_branch
        %1380 = sbr.rel (%p1378) target = $region60
      $region59: #{tpu_custom_call.1} parent=5 // pred_region
        %s1381 = ssub.s32 %s21, 2
        // Predicated region
        $region61: #{tpu_custom_call.1} parent=59 // pred_check
          %p1382 = pneg %p217
        $region62: #{tpu_custom_call.1} parent=59 // pred_check_branch
          %1384 = sbr.rel (%p1382) target = $region64
        $region63: #{tpu_custom_call.1} parent=59 // pred_region
          %s1385 = sand.u32 %s202, 1
          %s1386 = scalar_lea.sflag [#allocation3], %s1385
          %s1387 = sand.u32 %s202, 1
          %s1388 = smul.addr %s1387, 64
          %s1389 = scalar_lea.vmem [#allocation2], %s1388
          %1390 = dma.done %s1386, 1024
        $region64: #{tpu_custom_call.1} parent=59 // pred_fallthru
          _
        // Predicated region
        $region65: #{tpu_custom_call.1} parent=59 // pred_check
          %p1391 = pneg %p243
        $region66: #{tpu_custom_call.1} parent=59 // pred_check_branch
          %1393 = sbr.rel (%p1391) target = $region68
        $region67: #{tpu_custom_call.1} parent=59 // pred_region
          %s1394 = sand.u32 %s228, 1
          %s1395 = scalar_lea.sflag [#allocation5], %s1394
          %s1396 = sand.u32 %s228, 1
          %s1397 = smul.addr %s1396, 32
          %s1398 = scalar_lea.vmem [#allocation4], %s1397
          %1399 = dma.done %s1395, 512
        $region68: #{tpu_custom_call.1} parent=59 // pred_fallthru
          _
      $region60: #{tpu_custom_call.1} parent=5 // pred_fallthru
        _
    $region6: #{tpu_custom_call.1} parent=1 // loop_footer
      %s25 = sadd.s32 1, %s21
    $region7: #{tpu_custom_call.1} parent=1 // loop_footer_branch
      %20 = sbr.rel target = $region3
    $region8: #{tpu_custom_call.1} parent=1 // loop_exit
      _
    %1400 = vsyncpa [#allocation3], 1
    %s1401 = scalar_lea.sflag [#allocation3], 1
    %1402 = vsyncpa %s1401, 1
    %1403 = vsyncpa [#allocation5], 1
    %s1404 = scalar_lea.sflag [#allocation5], 1
    %1405 = vsyncpa %s1404, 1

</llo_original>
